<compile_context>
chip_gen: v7x
topology: tpu7x:2x2x1
jax: 0.10.0
libtpu: 0.0.40
codegen_flags: <defaults>
</compile_context>

<pallas_src>
import functools

import jax
import jax.numpy as jnp
from jax.experimental import pallas as pl
from jax.experimental.pallas import tpu as pltpu

SUBLANE = 8  # f32 sublane height (second-to-last block dim alignment)


def _round_up(x, m):
    return (x + m - 1) // m * m


def _cdiv(a, b):
    return (a + b - 1) // b


def mlp_kernel(x_ref, w1_ref, b1_ref, w2_ref, b2_ref, w3_ref, b3_ref, o_ref):
    """Whole 3-layer MLP forward for one (TB, num_inputs) row-tile of x.

    Linear(num_inputs,30) -> ReLU -> Linear(30,20) -> ReLU -> Linear(20,num_outputs)
    All intermediates stay in vregs; weights/biases are VMEM-resident blocks.
    """
    x = x_ref[...]                                                   # f32 (TB, in)

    h1 = jnp.dot(x, w1_ref[...], preferred_element_type=jnp.float32) + b1_ref[...]
    h1 = jnp.maximum(h1, 0.0)

    h2 = jnp.dot(h1, w2_ref[...], preferred_element_type=jnp.float32) + b2_ref[...]
    h2 = jnp.maximum(h2, 0.0)

    logits = jnp.dot(h2, w3_ref[...], preferred_element_type=jnp.float32) + b3_ref[...]
    o_ref[...] = logits.astype(o_ref.dtype)                          # narrow f32 store


@functools.partial(jax.jit, static_argnames=("tile_rows",))
def neural_network_forward(x, w1, b1, w2, b2, w3, b3, *, tile_rows=8192):
    B, num_inputs = x.shape
    h1_dim = w1.shape[1]
    h2_dim = w2.shape[1]
    num_outputs = w3.shape[1]

    # Tile over the batch:
    #  * tile_rows forced to a multiple of the f32 sublane height (8),
    #  * capped so the grid has at least 2 steps when B allows (v7x megacore),
    #  * capped at round_up(B, 8) so a single tile never grossly overhangs B.
    tile_rows = max(SUBLANE, _round_up(tile_rows, SUBLANE))
    two_step_cap = max(SUBLANE, _round_up(_cdiv(B, 2), SUBLANE))
    tb = min(tile_rows, two_step_cap, _round_up(B, SUBLANE))
    grid = (_cdiv(B, tb),)

    def resident(a):
        # Same block index every grid step -> block stays resident in VMEM.
        nd = a.ndim
        return pl.BlockSpec(a.shape, lambda *_: (0,) * nd)

    # Advisory cost: dominant bytes are x read + out write; compute is tiny.
    flops = 2 * B * (num_inputs * h1_dim + h1_dim * h2_dim + h2_dim * num_outputs)
    bytes_accessed = 4 * (
        x.size + B * num_outputs
        + w1.size + b1.size + w2.size + b2.size + w3.size + b3.size
    )
    cost = pl.CostEstimate(flops=flops, transcendentals=0,
                           bytes_accessed=bytes_accessed)

    out = pl.pallas_call(
        mlp_kernel,
        out_shape=jax.ShapeDtypeStruct((B, num_outputs), jnp.float32),
        grid=grid,
        in_specs=[
            pl.BlockSpec((tb, num_inputs), lambda i: (i, 0)),   # x: tiled over batch
            resident(w1), resident(b1),
            resident(w2), resident(b2),
            resident(w3), resident(b3),
        ],
        out_specs=pl.BlockSpec((tb, num_outputs), lambda i: (i, 0)),
        compiler_params=pltpu.CompilerParams(
            # batch axis is independent -> megacore-shardable on v7x
            dimension_semantics=("parallel",),
        ),
        cost_estimate=cost,
    )(x, w1, b1, w2, b2, w3, b3)

    return out


def init_linear_params(key, in_features, out_features):
    """Deterministic init matching torch.nn.Linear default:
    U(-1/sqrt(fan_in), 1/sqrt(fan_in)) for both weight and bias.
    Weight returned as (in_features, out_features) for y = x @ W + b."""
    kw, kb = jax.random.split(key)
    bound = 1.0 / jnp.sqrt(jnp.float32(in_features))
    w = jax.random.uniform(kw, (in_features, out_features), jnp.float32,
                           minval=-bound, maxval=bound)
    # bias kept 2D (1, out_features) so it broadcasts cleanly on TPU vregs
    b = jax.random.uniform(kb, (1, out_features), jnp.float32,
                           minval=-bound, maxval=bound)
    return w, b


def reference_forward(x, w1, b1, w2, b2, w3, b3):
    h1 = jnp.maximum(x @ w1 + b1, 0.0)
    h2 = jnp.maximum(h1 @ w2 + b2, 0.0)
    return h2 @ w3 + b3


if __name__ == "__main__":
    num_inputs, num_outputs = 32, 16
    batch = 8

    key = jax.random.PRNGKey(0)
    kx, k1, k2, k3 = jax.random.split(key, 4)

    x = jax.random.normal(kx, (batch, num_inputs), jnp.float32)
    w1, b1 = init_linear_params(k1, num_inputs, 30)
    w2, b2 = init_linear_params(k2, 30, 20)
    w3, b3 = init_linear_params(k3, 20, num_outputs)

    out = neural_network_forward(x, w1, b1, w2, b2, w3, b3)
    out = jax.block_until_ready(out)

    ref = reference_forward(x, w1, b1, w2, b2, w3, b3)
    assert out.shape == (batch, num_outputs)
    # Tolerance covers MXU default-precision f32 matmul vs. XLA reference.
    assert jnp.allclose(out, ref, atol=2e-2, rtol=2e-2)

    print("KERNEL_OK")
</pallas_src>

<mosaic_0001>
module attributes {stable_mosaic.version = 11 : i64} {
  func.func @mlp_kernel(%arg0: i32, %arg1: memref<8x32xf32, #tpu.memory_space<vmem>>, %arg2: memref<32x30xf32, #tpu.memory_space<vmem>>, %arg3: memref<1x30xf32, #tpu.memory_space<vmem>>, %arg4: memref<30x20xf32, #tpu.memory_space<vmem>>, %arg5: memref<1x20xf32, #tpu.memory_space<vmem>>, %arg6: memref<20x16xf32, #tpu.memory_space<vmem>>, %arg7: memref<1x16xf32, #tpu.memory_space<vmem>>, %arg8: memref<8x16xf32, #tpu.memory_space<vmem>>) attributes {dimension_semantics = [#tpu.dimension_semantics<parallel>], iteration_bounds = array<i64: 1>, scalar_prefetch = 0 : i64, scratch_operands = 0 : i64, tpu.core_type = #tpu.core_type<tc>, window_params = [{transform_indices = @transform_0, window_bounds = array<i64: 8, 32>}, {pipeline_mode = #tpu.pipeline_mode<synchronous>, transform_indices = @transform_1, window_bounds = array<i64: 32, 30>}, {pipeline_mode = #tpu.pipeline_mode<synchronous>, transform_indices = @transform_2, window_bounds = array<i64: 1, 30>}, {pipeline_mode = #tpu.pipeline_mode<synchronous>, transform_indices = @transform_3, window_bounds = array<i64: 30, 20>}, {pipeline_mode = #tpu.pipeline_mode<synchronous>, transform_indices = @transform_4, window_bounds = array<i64: 1, 20>}, {pipeline_mode = #tpu.pipeline_mode<synchronous>, transform_indices = @transform_5, window_bounds = array<i64: 20, 16>}, {pipeline_mode = #tpu.pipeline_mode<synchronous>, transform_indices = @transform_6, window_bounds = array<i64: 1, 16>}, {transform_indices = @transform_7, window_bounds = array<i64: 8, 16>}]} {
    %c0 = arith.constant 0 : index
    %c0_0 = arith.constant 0 : index
    %0 = vector.load %arg1[%c0, %c0_0] : memref<8x32xf32, #tpu.memory_space<vmem>>, vector<8x32xf32>
    %c0_1 = arith.constant 0 : index
    %c0_2 = arith.constant 0 : index
    %1 = vector.load %arg2[%c0_1, %c0_2] : memref<32x30xf32, #tpu.memory_space<vmem>>, vector<32x30xf32>
    %cst = arith.constant dense<0.000000e+00> : vector<8x30xf32>
    %2 = tpu.matmul %0, %1, %cst {dimension_numbers = #tpu.dot_dimension_numbers<[1], [0], [0], [1], [0, 0, 1, 1], [], []>} : vector<8x32xf32>, vector<32x30xf32>, vector<8x30xf32> -> vector<8x30xf32>
    %c0_3 = arith.constant 0 : index
    %c0_4 = arith.constant 0 : index
    %3 = vector.load %arg3[%c0_3, %c0_4] : memref<1x30xf32, #tpu.memory_space<vmem>>, vector<1x30xf32>
    %4 = vector.broadcast %3 : vector<1x30xf32> to vector<8x30xf32>
    %5 = arith.addf %2, %4 : vector<8x30xf32>
    %cst_5 = arith.constant 0.000000e+00 : f32
    %6 = vector.broadcast %cst_5 : f32 to vector<8x30xf32>
    %7 = arith.maximumf %5, %6 : vector<8x30xf32>
    %c0_6 = arith.constant 0 : index
    %c0_7 = arith.constant 0 : index
    %8 = vector.load %arg4[%c0_6, %c0_7] : memref<30x20xf32, #tpu.memory_space<vmem>>, vector<30x20xf32>
    %cst_8 = arith.constant dense<0.000000e+00> : vector<8x20xf32>
    %9 = tpu.matmul %7, %8, %cst_8 {dimension_numbers = #tpu.dot_dimension_numbers<[1], [0], [0], [1], [0, 0, 1, 1], [], []>} : vector<8x30xf32>, vector<30x20xf32>, vector<8x20xf32> -> vector<8x20xf32>
    %c0_9 = arith.constant 0 : index
    %c0_10 = arith.constant 0 : index
    %10 = vector.load %arg5[%c0_9, %c0_10] : memref<1x20xf32, #tpu.memory_space<vmem>>, vector<1x20xf32>
    %11 = vector.broadcast %10 : vector<1x20xf32> to vector<8x20xf32>
    %12 = arith.addf %9, %11 : vector<8x20xf32>
    %cst_11 = arith.constant 0.000000e+00 : f32
    %13 = vector.broadcast %cst_11 : f32 to vector<8x20xf32>
    %14 = arith.maximumf %12, %13 : vector<8x20xf32>
    %c0_12 = arith.constant 0 : index
    %c0_13 = arith.constant 0 : index
    %15 = vector.load %arg6[%c0_12, %c0_13] : memref<20x16xf32, #tpu.memory_space<vmem>>, vector<20x16xf32>
    %cst_14 = arith.constant dense<0.000000e+00> : vector<8x16xf32>
    %16 = tpu.matmul %14, %15, %cst_14 {dimension_numbers = #tpu.dot_dimension_numbers<[1], [0], [0], [1], [0, 0, 1, 1], [], []>} : vector<8x20xf32>, vector<20x16xf32>, vector<8x16xf32> -> vector<8x16xf32>
    %c0_15 = arith.constant 0 : index
    %c0_16 = arith.constant 0 : index
    %17 = vector.load %arg7[%c0_15, %c0_16] : memref<1x16xf32, #tpu.memory_space<vmem>>, vector<1x16xf32>
    %18 = vector.broadcast %17 : vector<1x16xf32> to vector<8x16xf32>
    %19 = arith.addf %16, %18 : vector<8x16xf32>
    %c0_17 = arith.constant 0 : index
    %c0_18 = arith.constant 0 : index
    %20 = vector.load %arg8[%c0_17, %c0_18] : memref<8x16xf32, #tpu.memory_space<vmem>>, vector<8x16xf32>
    tpu.vector_store %arg8[%c0_17, %c0_18], %19 {strides = array<i32>} : memref<8x16xf32, #tpu.memory_space<vmem>>, vector<8x16xf32>,
    return
  }
  func.func @transform_0(%arg0: i32) -> (i32, i32) {
    %c0_i32 = arith.constant 0 : i32
    %c0_i32_0 = arith.constant 0 : i32
    return %arg0, %c0_i32 : i32, i32
  }
  func.func @transform_1(%arg0: i32) -> (i32, i32) {
    %c0_i32 = arith.constant 0 : i32
    %c0_i32_0 = arith.constant 0 : i32
    %c0_i32_1 = arith.constant 0 : i32
    return %c0_i32, %c0_i32_0 : i32, i32
  }
  func.func @transform_2(%arg0: i32) -> (i32, i32) {
    %c0_i32 = arith.constant 0 : i32
    %c0_i32_0 = arith.constant 0 : i32
    %c0_i32_1 = arith.constant 0 : i32
    return %c0_i32, %c0_i32_0 : i32, i32
  }
  func.func @transform_3(%arg0: i32) -> (i32, i32) {
    %c0_i32 = arith.constant 0 : i32
    %c0_i32_0 = arith.constant 0 : i32
    %c0_i32_1 = arith.constant 0 : i32
    return %c0_i32, %c0_i32_0 : i32, i32
  }
  func.func @transform_4(%arg0: i32) -> (i32, i32) {
    %c0_i32 = arith.constant 0 : i32
    %c0_i32_0 = arith.constant 0 : i32
    %c0_i32_1 = arith.constant 0 : i32
    return %c0_i32, %c0_i32_0 : i32, i32
  }
  func.func @transform_5(%arg0: i32) -> (i32, i32) {
    %c0_i32 = arith.constant 0 : i32
    %c0_i32_0 = arith.constant 0 : i32
    %c0_i32_1 = arith.constant 0 : i32
    return %c0_i32, %c0_i32_0 : i32, i32
  }
  func.func @transform_6(%arg0: i32) -> (i32, i32) {
    %c0_i32 = arith.constant 0 : i32
    %c0_i32_0 = arith.constant 0 : i32
    %c0_i32_1 = arith.constant 0 : i32
    return %c0_i32, %c0_i32_0 : i32, i32
  }
  func.func @transform_7(%arg0: i32) -> (i32, i32) {
    %c0_i32 = arith.constant 0 : i32
    %c0_i32_0 = arith.constant 0 : i32
    return %arg0, %c0_i32 : i32, i32
  }
}

</mosaic_0001>

<llo_original>
// kernel: neural_network_forward.1
$region0: #{neural_network_forward.1}
  #allocation0 [shape = 'u32[]', space=smem, size = 0x4, offset = 0x4, fixed_abs, tag = 'smem constant byte address 0x4 - core index']
  #allocation1 [shape = 'u32[144,128]{1,0:T(1,128)}', space=vmem, size = 0x12000, scoped, tag = 'internal scratch']
  %s0 = inlined_call_operand.vmem [shape: f32[8,32], index: 0, kind: input, shape index: {}]
  %s1 = inlined_call_operand.vmem [shape: f32[32,30], index: 1, kind: input, shape index: {}]
  %s2 = inlined_call_operand.vmem [shape: f32[1,30], index: 2, kind: input, shape index: {}]
  %s3 = inlined_call_operand.vmem [shape: f32[30,20], index: 3, kind: input, shape index: {}]
  %s4 = inlined_call_operand.vmem [shape: f32[1,20], index: 4, kind: input, shape index: {}]
  %s5 = inlined_call_operand.vmem [shape: f32[20,16], index: 5, kind: input, shape index: {}]
  %s6 = inlined_call_operand.vmem [shape: f32[1,16], index: 6, kind: input, shape index: {}]
  %s7 = inlined_call_operand.hbm [shape: f32[8,16], index: 7, kind: output, shape index: {}]
  %s8 = sld [smem:[#allocation0]]
  $region38: #{neural_network_forward.1} parent=0
    _
  %s10 = ssub.s32 1, %s8
  %s11 = scalar_select 0, %s10, %s8
  $region1: #{neural_network_forward.1} parent=0
    #allocation2 [shape = 'u8[4096]{0}', space=vmem, size = 0x1000, scoped, tag = 'output window, operand 0, single buffered']
    #allocation3 [shape = 's32[1]{0}', space=sflag, size = 0x4, scoped, tag = 'scoped memory for neural_network_forward.1']
    %12 = vsyncpa [#allocation3], 0
    // Predicated region
    $region2: #{neural_network_forward.1} parent=1 // pred_check
      _
    $region3: #{neural_network_forward.1} parent=1 // pred_check_branch
      %14 = sbr.rel (0) target = $region5
    $region4: #{neural_network_forward.1} parent=1 // pred_region
      _
    $region5: #{neural_network_forward.1} parent=1 // pred_fallthru
      _
    // Predicated region
    $region6: #{neural_network_forward.1} parent=1 // pred_check
      _
    $region7: #{neural_network_forward.1} parent=1 // pred_check_branch
      %16 = sbr.rel (0) target = $region9
    $region8: #{neural_network_forward.1} parent=1 // pred_region
      _
    $region9: #{neural_network_forward.1} parent=1 // pred_fallthru
      _
    // Predicated region
    $region10: #{neural_network_forward.1} parent=1 // pred_check
      _
    $region11: #{neural_network_forward.1} parent=1 // pred_check_branch
      %18 = sbr.rel (0) target = $region13
    $region12: #{neural_network_forward.1} parent=1 // pred_region
      _
    $region13: #{neural_network_forward.1} parent=1 // pred_fallthru
      _
    // Predicated region
    $region14: #{neural_network_forward.1} parent=1 // pred_check
      _
    $region15: #{neural_network_forward.1} parent=1 // pred_check_branch
      %20 = sbr.rel (0) target = $region17
    $region16: #{neural_network_forward.1} parent=1 // pred_region
      _
    $region17: #{neural_network_forward.1} parent=1 // pred_fallthru
      _
    // Predicated region
    $region18: #{neural_network_forward.1} parent=1 // pred_check
      _
    $region19: #{neural_network_forward.1} parent=1 // pred_check_branch
      %22 = sbr.rel (0) target = $region21
    $region20: #{neural_network_forward.1} parent=1 // pred_region
      _
    $region21: #{neural_network_forward.1} parent=1 // pred_fallthru
      _
    // Predicated region
    $region22: #{neural_network_forward.1} parent=1 // pred_check
      _
    $region23: #{neural_network_forward.1} parent=1 // pred_check_branch
      %24 = sbr.rel (0) target = $region25
    $region24: #{neural_network_forward.1} parent=1 // pred_region
      _
    $region25: #{neural_network_forward.1} parent=1 // pred_fallthru
      _
    // Predicated region
    $region26: #{neural_network_forward.1} parent=1 // pred_check
      _
    $region27: #{neural_network_forward.1} parent=1 // pred_check_branch
      %26 = sbr.rel (0) target = $region29
    $region28: #{neural_network_forward.1} parent=1 // pred_region
      _
    $region29: #{neural_network_forward.1} parent=1 // pred_fallthru
      _
    %v27 = vld [vmem:[%s0] sm:$0xff]
    %v28 = vld [vmem:[%s1] sm:$0xff]
    %v29 = vld [vmem:[%s1 + $0x8] sm:$0xff]
    %v30 = vld [vmem:[%s1 + $0x10] sm:$0xff]
    %v31 = vld [vmem:[%s1 + $0x18] sm:$0xff]
    %v32 = vld [vmem:[%s2] sm:$0x1]
    %v34 = vlaneseq
    %v35 = vshrl.u32 %v34, 7
    %v36 = vsub.s32 0, %v35
    %v37 = vrot.slane %v32, %v36
    %vm39 = vcmask 261120
    %v41 = vsel %vm39, %v27, 0
    %43 = vmatprep.subr.mxu0 0.0
    %44 = vmatpush1.msra.mxu0 %v28
    %45 = vmatprep.subr.mxu0 0.0
    %46 = vmatpush1.msra.mxu0 %v29
    %47 = vmatprep.subr.mxu0 0.0
    %48 = vmatpush1.msra.mxu0 %v30
    %49 = vmatprep.subr.mxu0 0.0
    %50 = vmatpush1.msra.mxu0 %v31
    %51 = vmatprep.subr.mxu0 0.0
    %52 = vmatpush1.msra.mxu0 0.0
    %53 = vmatprep.subr.mxu0 0.0
    %54 = vmatpush1.msra.mxu0 0.0
    %55 = vmatprep.subr.mxu0 0.0
    %56 = vmatpush1.msra.mxu0 0.0
    %57 = vmatprep.subr.mxu0 0.0
    %58 = vmatpush1.msra.mxu0 0.0
    %59 = vmatprep.subr.mxu0 0.0
    %60 = vmatpush1.msra.mxu0 0.0
    %61 = vmatprep.subr.mxu0 0.0
    %62 = vmatpush1.msra.mxu0 0.0
    %63 = vmatprep.subr.mxu0 0.0
    %64 = vmatpush1.msra.mxu0 0.0
    %65 = vmatprep.subr.mxu0 0.0
    %66 = vmatpush1.msra.mxu0 0.0
    %67 = vmatprep.subr.mxu0 0.0
    %68 = vmatpush1.msra.mxu0 0.0
    %69 = vmatprep.subr.mxu0 0.0
    %70 = vmatpush1.msra.mxu0 0.0
    %71 = vmatprep.subr.mxu0 0.0
    %72 = vmatpush1.msra.mxu0 0.0
    %73 = vmatprep.subr.mxu0 0.0
    %74 = vmatpush1.msra.mxu0 0.0
    %75 = vmatprep.subr.mxu0 0.0
    %76 = vmatpush1.msra.mxu0 0.0
    %77 = vmatprep.subr.mxu0 0.0
    %78 = vmatpush1.msra.mxu0 0.0
    %79 = vmatprep.subr.mxu0 0.0
    %80 = vmatpush1.msra.mxu0 0.0
    %81 = vmatprep.subr.mxu0 0.0
    %82 = vmatpush1.msra.mxu0 0.0
    %83 = vmatprep.subr.mxu0 0.0
    %84 = vmatpush1.msra.mxu0 0.0
    %85 = vmatprep.subr.mxu0 0.0
    %86 = vmatpush1.msra.mxu0 0.0
    %87 = vmatprep.subr.mxu0 0.0
    %88 = vmatpush1.msra.mxu0 0.0
    %89 = vmatprep.subr.mxu0 0.0
    %90 = vmatpush1.msra.mxu0 0.0
    %91 = vmatprep.subr.mxu0 0.0
    %92 = vmatpush1.msra.mxu0 0.0
    %93 = vmatprep.subr.mxu0 0.0
    %94 = vmatpush1.msra.mxu0 0.0
    %95 = vmatprep.subr.mxu0 0.0
    %96 = vmatpush1.msra.mxu0 0.0
    %97 = vmatprep.subr.mxu0 0.0
    %98 = vmatpush1.msra.mxu0 0.0
    %99 = vmatprep.subr.mxu0 0.0
    %100 = vmatpush1.msra.mxu0 0.0
    %101 = vmatprep.subr.mxu0 0.0
    %102 = vmatpush1.msra.mxu0 0.0
    %103 = vmatprep.subr.mxu0 0.0
    %104 = vmatpush1.msra.mxu0 0.0
    %105 = vmatprep.subr.mxu0 0.0
    %106 = vmatpush1.msra.mxu0 0.0
    %107 = vmatprep.mubr.f32.mxu0 0.0
    %108 = vmatmul.mubr.f32.gmra.mrb[0].mxu0 %v41
    %v109 = vpop.f32.mrb[0].mxu0
    %v110 = vadd.f32 %v37, %v109
    %v111 = vpop.f32.mrb[0].mxu0
    %112 = vdwg.mxu0
    %v113 = vmax.f32 %v110, 0.0
    %v114 = vld [vmem:[%s3] sm:$0xff]
    %v115 = vld [vmem:[%s3 + $0x8] sm:$0xff]
    %v116 = vld [vmem:[%s3 + $0x10] sm:$0xff]
    %v117 = vld [vmem:[%s3 + $0x18] sm:$0x3f]
    %v118 = vld [vmem:[%s4] sm:$0x1]
    %v120 = vlaneseq
    %v121 = vshrl.u32 %v120, 7
    %v122 = vsub.s32 0, %v121
    %v123 = vrot.slane %v118, %v122
    %vm125 = vcmask 244736
    %v127 = vsel %vm125, %v113, 0
    %vm129 = vcmask 1045504
    %v131 = vsel %vm129, %v117, 0
    %133 = vmatprep.subr.mxu0 0.0
    %134 = vmatpush1.msra.mxu0 %v114
    %135 = vmatprep.subr.mxu0 0.0
    %136 = vmatpush1.msra.mxu0 %v115
    %137 = vmatprep.subr.mxu0 0.0
    %138 = vmatpush1.msra.mxu0 %v116
    %139 = vmatprep.subr.mxu0 0.0
    %140 = vmatpush1.msra.mxu0 %v131
    %141 = vmatprep.subr.mxu0 0.0
    %142 = vmatpush1.msra.mxu0 0.0
    %143 = vmatprep.subr.mxu0 0.0
    %144 = vmatpush1.msra.mxu0 0.0
    %145 = vmatprep.subr.mxu0 0.0
    %146 = vmatpush1.msra.mxu0 0.0
    %147 = vmatprep.subr.mxu0 0.0
    %148 = vmatpush1.msra.mxu0 0.0
    %149 = vmatprep.subr.mxu0 0.0
    %150 = vmatpush1.msra.mxu0 0.0
    %151 = vmatprep.subr.mxu0 0.0
    %152 = vmatpush1.msra.mxu0 0.0
    %153 = vmatprep.subr.mxu0 0.0
    %154 = vmatpush1.msra.mxu0 0.0
    %155 = vmatprep.subr.mxu0 0.0
    %156 = vmatpush1.msra.mxu0 0.0
    %157 = vmatprep.subr.mxu0 0.0
    %158 = vmatpush1.msra.mxu0 0.0
    %159 = vmatprep.subr.mxu0 0.0
    %160 = vmatpush1.msra.mxu0 0.0
    %161 = vmatprep.subr.mxu0 0.0
    %162 = vmatpush1.msra.mxu0 0.0
    %163 = vmatprep.subr.mxu0 0.0
    %164 = vmatpush1.msra.mxu0 0.0
    %165 = vmatprep.subr.mxu0 0.0
    %166 = vmatpush1.msra.mxu0 0.0
    %167 = vmatprep.subr.mxu0 0.0
    %168 = vmatpush1.msra.mxu0 0.0
    %169 = vmatprep.subr.mxu0 0.0
    %170 = vmatpush1.msra.mxu0 0.0
    %171 = vmatprep.subr.mxu0 0.0
    %172 = vmatpush1.msra.mxu0 0.0
    %173 = vmatprep.subr.mxu0 0.0
    %174 = vmatpush1.msra.mxu0 0.0
    %175 = vmatprep.subr.mxu0 0.0
    %176 = vmatpush1.msra.mxu0 0.0
    %177 = vmatprep.subr.mxu0 0.0
    %178 = vmatpush1.msra.mxu0 0.0
    %179 = vmatprep.subr.mxu0 0.0
    %180 = vmatpush1.msra.mxu0 0.0
    %181 = vmatprep.subr.mxu0 0.0
    %182 = vmatpush1.msra.mxu0 0.0
    %183 = vmatprep.subr.mxu0 0.0
    %184 = vmatpush1.msra.mxu0 0.0
    %185 = vmatprep.subr.mxu0 0.0
    %186 = vmatpush1.msra.mxu0 0.0
    %187 = vmatprep.subr.mxu0 0.0
    %188 = vmatpush1.msra.mxu0 0.0
    %189 = vmatprep.subr.mxu0 0.0
    %190 = vmatpush1.msra.mxu0 0.0
    %191 = vmatprep.subr.mxu0 0.0
    %192 = vmatpush1.msra.mxu0 0.0
    %193 = vmatprep.subr.mxu0 0.0
    %194 = vmatpush1.msra.mxu0 0.0
    %195 = vmatprep.subr.mxu0 0.0
    %196 = vmatpush1.msra.mxu0 0.0
    %197 = vmatprep.mubr.f32.mxu0 0.0
    %198 = vmatmul.mubr.f32.gmra.mrb[0].mxu0 %v127
    %v199 = vpop.f32.mrb[0].mxu0
    %v200 = vadd.f32 %v123, %v199
    %v201 = vpop.f32.mrb[0].mxu0
    %202 = vdwg.mxu0
    %v203 = vmax.f32 %v200, 0.0
    %v204 = vld [vmem:[%s5] sm:$0xff]
    %v205 = vld [vmem:[%s5 + $0x8] sm:$0xff]
    %v206 = vld [vmem:[%s5 + $0x10] sm:$0xf]
    %v207 = vld [vmem:[%s6] sm:$0x1]
    %v209 = vlaneseq
    %v210 = vshrl.u32 %v209, 7
    %v211 = vsub.s32 0, %v210
    %v212 = vrot.slane %v207, %v211
    %vm214 = vcmask 162816
    %v216 = vsel %vm214, %v203, 0
    %vm218 = vcmask 1043456
    %v220 = vsel %vm218, %v206, 0
    %222 = vmatprep.subr.mxu0 0.0
    %223 = vmatpush1.msra.mxu0 %v204
    %224 = vmatprep.subr.mxu0 0.0
    %225 = vmatpush1.msra.mxu0 %v205
    %226 = vmatprep.subr.mxu0 0.0
    %227 = vmatpush1.msra.mxu0 %v220
    %228 = vmatprep.subr.mxu0 0.0
    %229 = vmatpush1.msra.mxu0 0.0
    %230 = vmatprep.subr.mxu0 0.0
    %231 = vmatpush1.msra.mxu0 0.0
    %232 = vmatprep.subr.mxu0 0.0
    %233 = vmatpush1.msra.mxu0 0.0
    %234 = vmatprep.subr.mxu0 0.0
    %235 = vmatpush1.msra.mxu0 0.0
    %236 = vmatprep.subr.mxu0 0.0
    %237 = vmatpush1.msra.mxu0 0.0
    %238 = vmatprep.subr.mxu0 0.0
    %239 = vmatpush1.msra.mxu0 0.0
    %240 = vmatprep.subr.mxu0 0.0
    %241 = vmatpush1.msra.mxu0 0.0
    %242 = vmatprep.subr.mxu0 0.0
    %243 = vmatpush1.msra.mxu0 0.0
    %244 = vmatprep.subr.mxu0 0.0
    %245 = vmatpush1.msra.mxu0 0.0
    %246 = vmatprep.subr.mxu0 0.0
    %247 = vmatpush1.msra.mxu0 0.0
    %248 = vmatprep.subr.mxu0 0.0
    %249 = vmatpush1.msra.mxu0 0.0
    %250 = vmatprep.subr.mxu0 0.0
    %251 = vmatpush1.msra.mxu0 0.0
    %252 = vmatprep.subr.mxu0 0.0
    %253 = vmatpush1.msra.mxu0 0.0
    %254 = vmatprep.subr.mxu0 0.0
    %255 = vmatpush1.msra.mxu0 0.0
    %256 = vmatprep.subr.mxu0 0.0
    %257 = vmatpush1.msra.mxu0 0.0
    %258 = vmatprep.subr.mxu0 0.0
    %259 = vmatpush1.msra.mxu0 0.0
    %260 = vmatprep.subr.mxu0 0.0
    %261 = vmatpush1.msra.mxu0 0.0
    %262 = vmatprep.subr.mxu0 0.0
    %263 = vmatpush1.msra.mxu0 0.0
    %264 = vmatprep.subr.mxu0 0.0
    %265 = vmatpush1.msra.mxu0 0.0
    %266 = vmatprep.subr.mxu0 0.0
    %267 = vmatpush1.msra.mxu0 0.0
    %268 = vmatprep.subr.mxu0 0.0
    %269 = vmatpush1.msra.mxu0 0.0
    %270 = vmatprep.subr.mxu0 0.0
    %271 = vmatpush1.msra.mxu0 0.0
    %272 = vmatprep.subr.mxu0 0.0
    %273 = vmatpush1.msra.mxu0 0.0
    %274 = vmatprep.subr.mxu0 0.0
    %275 = vmatpush1.msra.mxu0 0.0
    %276 = vmatprep.subr.mxu0 0.0
    %277 = vmatpush1.msra.mxu0 0.0
    %278 = vmatprep.subr.mxu0 0.0
    %279 = vmatpush1.msra.mxu0 0.0
    %280 = vmatprep.subr.mxu0 0.0
    %281 = vmatpush1.msra.mxu0 0.0
    %282 = vmatprep.subr.mxu0 0.0
    %283 = vmatpush1.msra.mxu0 0.0
    %284 = vmatprep.subr.mxu0 0.0
    %285 = vmatpush1.msra.mxu0 0.0
    %286 = vmatprep.mubr.f32.mxu0 0.0
    %287 = vmatmul.mubr.f32.gmra.mrb[0].mxu0 %v216
    %v288 = vpop.f32.mrb[0].mxu0
    %v289 = vadd.f32 %v212, %v288
    %v290 = vpop.f32.mrb[0].mxu0
    %291 = vdwg.mxu0
    %vm292 = vcmask 130048
    %293 = vst.msk [vmem:[#allocation2] sm:$0xff] %vm292, %v289
    // Predicated region
    $region30: #{neural_network_forward.1} parent=1 // pred_check
      _
    $region31: #{neural_network_forward.1} parent=1 // pred_check_branch
      %295 = sbr.rel (0) target = $region33
    $region32: #{neural_network_forward.1} parent=1 // pred_region
      %s297 = ssub.s32 128, 128
      %298 = vsyncadd [#allocation3], %s297
      %s300 = sshll.u32 [#allocation2], 4
      %s301 = int_to_ptr.vmem [resolvable:$true] %s300
      %303 = dma.vmem_to_hbm [thread:$0]  %s301, 128, %s7, [#allocation3]
    $region33: #{neural_network_forward.1} parent=1 // pred_fallthru
      _
    // Predicated region
    $region34: #{neural_network_forward.1} parent=1 // pred_check
      _
    $region35: #{neural_network_forward.1} parent=1 // pred_check_branch
      %305 = sbr.rel (0) target = $region37
    $region36: #{neural_network_forward.1} parent=1 // pred_region
      %306 = dma.done [#allocation3], 128
    $region37: #{neural_network_forward.1} parent=1 // pred_fallthru
      _
    %307 = vsyncpa [#allocation3], 1

</llo_original>
